<compile_context>
chip_gen: v7x
topology: tpu7x:2x2x1
jax: 0.10.0
libtpu: 0.0.40
codegen_flags: <defaults>
</compile_context>

<pallas_src>
import functools

import jax
import jax.numpy as jnp
from jax.experimental import pallas as pl
from jax.experimental.pallas import tpu as pltpu


_VMEM_LIMIT_BYTES = 32 * 1024 * 1024  # explicit; fits v5e/v6e/v7x scoped VMEM


def _round_up(x, m):
    return ((x + m - 1) // m) * m


def _tdnn_pass1_kernel(x_ref, w_ref, b_ref, h_ref, sum_ref, ssq_ref, *,
                       context_size, dilation, tile_t, valid_t):
    """Affine (fused unfold) + ReLU for one (batch, time-tile); accumulate BN stats.

    x_ref  : (T_pad, D)           current batch, whole (padded) sequence
    w_ref  : (CS, D, O_pad)       per-frame weight slices (VMEM resident)
    b_ref  : (1, O_pad)           bias
    h_ref  : (tile_t, O_pad)      un-normalized activations for this tile
    sum_ref/ssq_ref : (1, O_pad)  global per-channel sum / sum-of-squares (f32)
    """
    b_i = pl.program_id(0)
    t_i = pl.program_id(1)

    @pl.when(jnp.logical_and(b_i == 0, t_i == 0))
    def _init():
        sum_ref[...] = jnp.zeros_like(sum_ref)
        ssq_ref[...] = jnp.zeros_like(ssq_ref)

    o_pad = h_ref.shape[-1]
    t0 = pl.multiple_of(t_i * tile_t, tile_t)

    # Fused unfold: h = sum_c x[t0+c*dil : t0+c*dil+tile_t, :] @ W_c   (f32 acc)
    acc = jnp.zeros((tile_t, o_pad), jnp.float32)
    for c in range(context_size):
        xs = x_ref[pl.ds(t0 + c * dilation, tile_t), :]
        acc = acc + jnp.dot(xs, w_ref[c], preferred_element_type=jnp.float32)

    h = jnp.maximum(acc + b_ref[...], 0.0)  # bias + ReLU
    h_ref[...] = h

    # Mask out rows that only exist because of time padding, then accumulate
    # global per-channel statistics (f32).
    row = jax.lax.broadcasted_iota(jnp.int32, (tile_t, 1), 0)
    hm = jnp.where((t0 + row) < valid_t, h, 0.0)
    sum_ref[...] += jnp.sum(hm, axis=0, keepdims=True)
    ssq_ref[...] += jnp.sum(hm * hm, axis=0, keepdims=True)


def _bn_apply_kernel(h_ref, scale_ref, shift_ref, o_ref):
    # Normalization with hoisted per-channel scale/shift: one fused mul-add.
    o_ref[...] = h_ref[...] * scale_ref[...] + shift_ref[...]


def tdnn_forward(x, weight, bias, *, context_size, dilation, batch_norm=True,
                 eps=1e-5, max_tile_t=512):
    """x: (B, T, D).  weight: (out_dim, D*context_size) as in nn.Linear.
    Returns (B, new_T, out_dim), new_T = T - dilation*(context_size-1)."""
    B, T, D = x.shape
    out_dim = weight.shape[0]
    new_T = T - dilation * (context_size - 1)
    assert new_T > 0, "sequence too short for this context/dilation"

    # Lane/MXU-friendly padding and tile sizes.
    o_pad = _round_up(out_dim, 128)
    tile_t = min(max_tile_t, _round_up(new_T, 8))
    n_t = -(-new_T // tile_t)
    new_T_pad = n_t * tile_t
    T_pad = new_T_pad + dilation * (context_size - 1)

    x_p = x if T_pad == T else jnp.pad(x, ((0, 0), (0, T_pad - T), (0, 0)))

    # weight[o, c*D + f]  ->  w3[c, f, o]   (frame-major unfold ordering),
    # zero-padded on the output-channel axis to o_pad.
    w3 = jnp.transpose(weight.astype(jnp.float32).reshape(out_dim, context_size, D),
                       (1, 2, 0))
    w3 = jnp.pad(w3, ((0, 0), (0, 0), (0, o_pad - out_dim)))
    b2 = jnp.pad(bias.astype(jnp.float32).reshape(1, out_dim),
                 ((0, 0), (0, o_pad - out_dim)))

    kernel = functools.partial(_tdnn_pass1_kernel, context_size=context_size,
                               dilation=dilation, tile_t=tile_t, valid_t=new_T)

    h_flat, ch_sum, ch_ssq = pl.pallas_call(
        kernel,
        out_shape=(
            jax.ShapeDtypeStruct((B * new_T_pad, o_pad), jnp.float32),
            jax.ShapeDtypeStruct((1, o_pad), jnp.float32),
            jax.ShapeDtypeStruct((1, o_pad), jnp.float32),
        ),
        grid=(B, n_t),
        in_specs=[
            # whole (padded) sequence of the current batch, resident across t
            pl.BlockSpec((None, T_pad, D), lambda b, t: (b, 0, 0)),
            # weights / bias: constant index -> stay in VMEM for the whole grid
            pl.BlockSpec((context_size, D, o_pad), lambda b, t: (0, 0, 0)),
            pl.BlockSpec((1, o_pad), lambda b, t: (0, 0)),
        ],
        out_specs=(
            pl.BlockSpec((tile_t, o_pad), lambda b, t: (b * n_t + t, 0)),
            pl.BlockSpec((1, o_pad), lambda b, t: (0, 0)),   # resident accumulator
            pl.BlockSpec((1, o_pad), lambda b, t: (0, 0)),   # resident accumulator
        ),
        compiler_params=pltpu.CompilerParams(
            dimension_semantics=("arbitrary", "arbitrary"),
            vmem_limit_bytes=_VMEM_LIMIT_BYTES),
    )(x_p, w3, b2)

    if batch_norm:
        # BatchNorm1d(affine=False), training mode: batch stats over (B, new_T),
        # biased variance.  Tiny (1, O_pad) glue math in f32.
        count = jnp.float32(B * new_T)
        mean = ch_sum / count
        var = jnp.maximum(ch_ssq / count - mean * mean, 0.0)
        inv_std = jax.lax.rsqrt(var + eps)
        scale = inv_std
        shift = -mean * inv_std

        out_flat = pl.pallas_call(
            _bn_apply_kernel,
            out_shape=jax.ShapeDtypeStruct((B * new_T_pad, o_pad), jnp.float32),
            grid=(B * n_t,),
            in_specs=[
                pl.BlockSpec((tile_t, o_pad), lambda i: (i, 0)),
                pl.BlockSpec((1, o_pad), lambda i: (0, 0)),
                pl.BlockSpec((1, o_pad), lambda i: (0, 0)),
            ],
            out_specs=pl.BlockSpec((tile_t, o_pad), lambda i: (i, 0)),
            compiler_params=pltpu.CompilerParams(
                dimension_semantics=("parallel",),
                vmem_limit_bytes=_VMEM_LIMIT_BYTES),
        )(h_flat, scale, shift)
    else:
        out_flat = h_flat

    # Drop time/channel padding.
    return out_flat.reshape(B, new_T_pad, o_pad)[:, :new_T, :out_dim]


def _tdnn_reference(x, weight, bias, *, context_size, dilation, batch_norm=True,
                    eps=1e-5):
    """Pure-JAX reference mirroring the PyTorch module's forward."""
    B, T, D = x.shape
    new_T = T - dilation * (context_size - 1)
    frames = [x[:, i * dilation: i * dilation + new_T, :] for i in range(context_size)]
    xu = jnp.concatenate(frames, axis=-1).astype(jnp.float32)
    h = jnp.einsum("btk,ok->bto", xu, weight.astype(jnp.float32)) + bias
    h = jnp.maximum(h, 0.0)
    if batch_norm:
        mean = jnp.mean(h, axis=(0, 1))
        var = jnp.mean((h - mean) ** 2, axis=(0, 1))
        h = (h - mean) * jax.lax.rsqrt(var + eps)
    return h


if __name__ == "__main__":
    # Small deterministic setup consistent with the module's forward.
    batch = 2
    seq_len = 16
    input_dim = 8
    output_dim = 32
    context_size = 5
    dilation = 1

    key = jax.random.PRNGKey(0)
    kx, kw, kb = jax.random.split(key, 3)

    x = jax.random.normal(kx, (batch, seq_len, input_dim), dtype=jnp.float32)
    fan_in = input_dim * context_size
    bound = 1.0 / (fan_in ** 0.5)
    weight = jax.random.uniform(kw, (output_dim, fan_in), minval=-bound, maxval=bound,
                                dtype=jnp.float32)
    bias = jax.random.uniform(kb, (output_dim,), minval=-bound, maxval=bound,
                              dtype=jnp.float32)

    y = tdnn_forward(x, weight, bias, context_size=context_size,
                     dilation=dilation, batch_norm=True)
    y = jax.block_until_ready(y)

    expected_T = seq_len - dilation * (context_size - 1)
    assert y.shape == (batch, expected_T, output_dim), y.shape
    assert bool(jnp.all(jnp.isfinite(y)))

    y_ref = _tdnn_reference(x, weight, bias, context_size=context_size,
                            dilation=dilation, batch_norm=True)
    assert bool(jnp.allclose(y, y_ref, rtol=2e-4, atol=2e-4)), \
        float(jnp.max(jnp.abs(y - y_ref)))

    # TODO(synk): BatchNorm running_mean/running_var buffer updates are not
    # emitted (only the training-mode forward output, which the spec returns).
    print("KERNEL_OK")
</pallas_src>

<mosaic_0001>
module attributes {stable_mosaic.version = 11 : i64} {
  func.func @_tdnn_pass1_kernel(%arg0: i32, %arg1: i32, %arg2: memref<1x20x8xf32, #tpu.memory_space<vmem>>, %arg3: memref<5x8x128xf32, #tpu.memory_space<vmem>>, %arg4: memref<1x128xf32, #tpu.memory_space<vmem>>, %arg5: memref<16x128xf32, #tpu.memory_space<vmem>>, %arg6: memref<1x128xf32, #tpu.memory_space<vmem>>, %arg7: memref<1x128xf32, #tpu.memory_space<vmem>>) attributes {dimension_semantics = [#tpu.dimension_semantics<arbitrary>, #tpu.dimension_semantics<arbitrary>], iteration_bounds = array<i64: 2, 1>, scalar_prefetch = 0 : i64, scratch_operands = 0 : i64, tpu.core_type = #tpu.core_type<tc>, window_params = [{transform_indices = @transform_0, window_bounds = array<i64: 1, 20, 8>}, {pipeline_mode = #tpu.pipeline_mode<synchronous>, transform_indices = @transform_1, window_bounds = array<i64: 5, 8, 128>}, {pipeline_mode = #tpu.pipeline_mode<synchronous>, transform_indices = @transform_2, window_bounds = array<i64: 1, 128>}, {transform_indices = @transform_3, window_bounds = array<i64: 16, 128>}, {pipeline_mode = #tpu.pipeline_mode<synchronous>, transform_indices = @transform_4, window_bounds = array<i64: 1, 128>}, {pipeline_mode = #tpu.pipeline_mode<synchronous>, transform_indices = @transform_5, window_bounds = array<i64: 1, 128>}]} {
    %c0_i32 = arith.constant 0 : i32
    %0 = arith.cmpi eq, %arg0, %c0_i32 : i32
    %c0_i32_0 = arith.constant 0 : i32
    %1 = arith.cmpi eq, %arg1, %c0_i32_0 : i32
    %2 = arith.andi %0, %1 : i1
    %3 = arith.extui %2 : i1 to i32
    %c0_i32_1 = arith.constant 0 : i32
    %4 = arith.cmpi ne, %3, %c0_i32_1 : i32
    scf.if %4 {
      %cst_44 = arith.constant 0.000000e+00 : f32
      %74 = vector.broadcast %cst_44 : f32 to vector<1x128xf32>
      %c0_45 = arith.constant 0 : index
      %c0_46 = arith.constant 0 : index
      %75 = vector.load %arg6[%c0_45, %c0_46] : memref<1x128xf32, #tpu.memory_space<vmem>>, vector<1x128xf32>
      tpu.vector_store %arg6[%c0_45, %c0_46], %74 {strides = array<i32>} : memref<1x128xf32, #tpu.memory_space<vmem>>, vector<1x128xf32>,
      %cst_47 = arith.constant 0.000000e+00 : f32
      %76 = vector.broadcast %cst_47 : f32 to vector<1x128xf32>
      %c0_48 = arith.constant 0 : index
      %c0_49 = arith.constant 0 : index
      %77 = vector.load %arg7[%c0_48, %c0_49] : memref<1x128xf32, #tpu.memory_space<vmem>>, vector<1x128xf32>
      tpu.vector_store %arg7[%c0_48, %c0_49], %76 {strides = array<i32>} : memref<1x128xf32, #tpu.memory_space<vmem>>, vector<1x128xf32>,
    } else {
    }
    %c16_i32 = arith.constant 16 : i32
    %5 = arith.muli %arg1, %c16_i32 : i32
    %6 = tpu.assume_multiple %5, 16 : i32
    %cst = arith.constant 0.000000e+00 : f32
    %7 = vector.broadcast %cst : f32 to vector<16x128xf32>
    %c0_i32_2 = arith.constant 0 : i32
    %8 = arith.addi %6, %c0_i32_2 : i32
    %c0 = arith.constant 0 : index
    %9 = arith.index_cast %8 : i32 to index
    %c0_3 = arith.constant 0 : index
    %10 = vector.load %arg2[%c0, %9, %c0_3] : memref<1x20x8xf32, #tpu.memory_space<vmem>>, vector<1x16x8xf32>
    %11 = vector.shape_cast %10 : vector<1x16x8xf32> to vector<16x8xf32>
    %c0_4 = arith.constant 0 : index
    %c0_5 = arith.constant 0 : index
    %c0_6 = arith.constant 0 : index
    %12 = vector.load %arg3[%c0_4, %c0_5, %c0_6] : memref<5x8x128xf32, #tpu.memory_space<vmem>>, vector<1x8x128xf32>
    %13 = vector.shape_cast %12 : vector<1x8x128xf32> to vector<8x128xf32>
    %cst_7 = arith.constant dense<0.000000e+00> : vector<16x128xf32>
    %14 = tpu.matmul %11, %13, %cst_7 {dimension_numbers = #tpu.dot_dimension_numbers<[1], [0], [0], [1], [0, 0, 1, 1], [], []>} : vector<16x8xf32>, vector<8x128xf32>, vector<16x128xf32> -> vector<16x128xf32>
    %15 = arith.addf %7, %14 : vector<16x128xf32>
    %c1_i32 = arith.constant 1 : i32
    %16 = arith.addi %6, %c1_i32 : i32
    %c0_8 = arith.constant 0 : index
    %17 = arith.index_cast %16 : i32 to index
    %c0_9 = arith.constant 0 : index
    %18 = vector.load %arg2[%c0_8, %17, %c0_9] : memref<1x20x8xf32, #tpu.memory_space<vmem>>, vector<1x16x8xf32>
    %19 = vector.shape_cast %18 : vector<1x16x8xf32> to vector<16x8xf32>
    %c1 = arith.constant 1 : index
    %c0_10 = arith.constant 0 : index
    %c0_11 = arith.constant 0 : index
    %20 = vector.load %arg3[%c1, %c0_10, %c0_11] : memref<5x8x128xf32, #tpu.memory_space<vmem>>, vector<1x8x128xf32>
    %21 = vector.shape_cast %20 : vector<1x8x128xf32> to vector<8x128xf32>
    %cst_12 = arith.constant dense<0.000000e+00> : vector<16x128xf32>
    %22 = tpu.matmul %19, %21, %cst_12 {dimension_numbers = #tpu.dot_dimension_numbers<[1], [0], [0], [1], [0, 0, 1, 1], [], []>} : vector<16x8xf32>, vector<8x128xf32>, vector<16x128xf32> -> vector<16x128xf32>
    %23 = arith.addf %15, %22 : vector<16x128xf32>
    %c2_i32 = arith.constant 2 : i32
    %24 = arith.addi %6, %c2_i32 : i32
    %c0_13 = arith.constant 0 : index
    %25 = arith.index_cast %24 : i32 to index
    %c0_14 = arith.constant 0 : index
    %26 = vector.load %arg2[%c0_13, %25, %c0_14] : memref<1x20x8xf32, #tpu.memory_space<vmem>>, vector<1x16x8xf32>
    %27 = vector.shape_cast %26 : vector<1x16x8xf32> to vector<16x8xf32>
    %c2 = arith.constant 2 : index
    %c0_15 = arith.constant 0 : index
    %c0_16 = arith.constant 0 : index
    %28 = vector.load %arg3[%c2, %c0_15, %c0_16] : memref<5x8x128xf32, #tpu.memory_space<vmem>>, vector<1x8x128xf32>
    %29 = vector.shape_cast %28 : vector<1x8x128xf32> to vector<8x128xf32>
    %cst_17 = arith.constant dense<0.000000e+00> : vector<16x128xf32>
    %30 = tpu.matmul %27, %29, %cst_17 {dimension_numbers = #tpu.dot_dimension_numbers<[1], [0], [0], [1], [0, 0, 1, 1], [], []>} : vector<16x8xf32>, vector<8x128xf32>, vector<16x128xf32> -> vector<16x128xf32>
    %31 = arith.addf %23, %30 : vector<16x128xf32>
    %c3_i32 = arith.constant 3 : i32
    %32 = arith.addi %6, %c3_i32 : i32
    %c0_18 = arith.constant 0 : index
    %33 = arith.index_cast %32 : i32 to index
    %c0_19 = arith.constant 0 : index
    %34 = vector.load %arg2[%c0_18, %33, %c0_19] : memref<1x20x8xf32, #tpu.memory_space<vmem>>, vector<1x16x8xf32>
    %35 = vector.shape_cast %34 : vector<1x16x8xf32> to vector<16x8xf32>
    %c3 = arith.constant 3 : index
    %c0_20 = arith.constant 0 : index
    %c0_21 = arith.constant 0 : index
    %36 = vector.load %arg3[%c3, %c0_20, %c0_21] : memref<5x8x128xf32, #tpu.memory_space<vmem>>, vector<1x8x128xf32>
    %37 = vector.shape_cast %36 : vector<1x8x128xf32> to vector<8x128xf32>
    %cst_22 = arith.constant dense<0.000000e+00> : vector<16x128xf32>
    %38 = tpu.matmul %35, %37, %cst_22 {dimension_numbers = #tpu.dot_dimension_numbers<[1], [0], [0], [1], [0, 0, 1, 1], [], []>} : vector<16x8xf32>, vector<8x128xf32>, vector<16x128xf32> -> vector<16x128xf32>
    %39 = arith.addf %31, %38 : vector<16x128xf32>
    %c4_i32 = arith.constant 4 : i32
    %40 = arith.addi %6, %c4_i32 : i32
    %c0_23 = arith.constant 0 : index
    %41 = arith.index_cast %40 : i32 to index
    %c0_24 = arith.constant 0 : index
    %42 = vector.load %arg2[%c0_23, %41, %c0_24] : memref<1x20x8xf32, #tpu.memory_space<vmem>>, vector<1x16x8xf32>
    %43 = vector.shape_cast %42 : vector<1x16x8xf32> to vector<16x8xf32>
    %c4 = arith.constant 4 : index
    %c0_25 = arith.constant 0 : index
    %c0_26 = arith.constant 0 : index
    %44 = vector.load %arg3[%c4, %c0_25, %c0_26] : memref<5x8x128xf32, #tpu.memory_space<vmem>>, vector<1x8x128xf32>
    %45 = vector.shape_cast %44 : vector<1x8x128xf32> to vector<8x128xf32>
    %cst_27 = arith.constant dense<0.000000e+00> : vector<16x128xf32>
    %46 = tpu.matmul %43, %45, %cst_27 {dimension_numbers = #tpu.dot_dimension_numbers<[1], [0], [0], [1], [0, 0, 1, 1], [], []>} : vector<16x8xf32>, vector<8x128xf32>, vector<16x128xf32> -> vector<16x128xf32>
    %47 = arith.addf %39, %46 : vector<16x128xf32>
    %c0_28 = arith.constant 0 : index
    %c0_29 = arith.constant 0 : index
    %48 = vector.load %arg4[%c0_28, %c0_29] : memref<1x128xf32, #tpu.memory_space<vmem>>, vector<1x128xf32>
    %49 = vector.broadcast %48 : vector<1x128xf32> to vector<16x128xf32>
    %50 = arith.addf %47, %49 : vector<16x128xf32>
    %cst_30 = arith.constant 0.000000e+00 : f32
    %51 = vector.broadcast %cst_30 : f32 to vector<16x128xf32>
    %52 = arith.maximumf %50, %51 : vector<16x128xf32>
    %c0_31 = arith.constant 0 : index
    %c0_32 = arith.constant 0 : index
    %53 = vector.load %arg5[%c0_31, %c0_32] : memref<16x128xf32, #tpu.memory_space<vmem>>, vector<16x128xf32>
    tpu.vector_store %arg5[%c0_31, %c0_32], %52 {strides = array<i32>} : memref<16x128xf32, #tpu.memory_space<vmem>>, vector<16x128xf32>,
    %54 = tpu.iota {dimensions = array<i32: 0>} : vector<16x1xi32>
    %55 = vector.broadcast %6 : i32 to vector<16x1xi32>
    %56 = arith.addi %55, %54 : vector<16x1xi32>
    %c12_i32 = arith.constant 12 : i32
    %57 = vector.broadcast %c12_i32 : i32 to vector<16x1xi32>
    %58 = arith.cmpi slt, %56, %57 : vector<16x1xi32>
    %cst_33 = arith.constant 0.000000e+00 : f32
    %59 = vector.shape_cast %58 : vector<16x1xi1> to vector<16x1xi1>
    %60 = vector.broadcast %59 : vector<16x1xi1> to vector<16x128xi1>
    %61 = vector.broadcast %cst_33 : f32 to vector<16x128xf32>
    %62 = arith.select %60, %52, %61 : vector<16x128xi1>, vector<16x128xf32>
    %c0_34 = arith.constant 0 : index
    %c0_35 = arith.constant 0 : index
    %63 = vector.load %arg6[%c0_34, %c0_35] : memref<1x128xf32, #tpu.memory_space<vmem>>, vector<1x128xf32>
    %cst_36 = arith.constant dense<0.000000e+00> : vector<128xf32>
    %64 = vector.multi_reduction <add>, %62, %cst_36 [0] : vector<16x128xf32> to vector<128xf32>
    %65 = vector.shape_cast %64 : vector<128xf32> to vector<1x128xf32>
    %66 = arith.addf %63, %65 : vector<1x128xf32>
    %c0_37 = arith.constant 0 : index
    %c0_38 = arith.constant 0 : index
    %67 = vector.load %arg6[%c0_37, %c0_38] : memref<1x128xf32, #tpu.memory_space<vmem>>, vector<1x128xf32>
    tpu.vector_store %arg6[%c0_37, %c0_38], %66 {strides = array<i32>} : memref<1x128xf32, #tpu.memory_space<vmem>>, vector<1x128xf32>,
    %c0_39 = arith.constant 0 : index
    %c0_40 = arith.constant 0 : index
    %68 = vector.load %arg7[%c0_39, %c0_40] : memref<1x128xf32, #tpu.memory_space<vmem>>, vector<1x128xf32>
    %69 = arith.mulf %62, %62 : vector<16x128xf32>
    %cst_41 = arith.constant dense<0.000000e+00> : vector<128xf32>
    %70 = vector.multi_reduction <add>, %69, %cst_41 [0] : vector<16x128xf32> to vector<128xf32>
    %71 = vector.shape_cast %70 : vector<128xf32> to vector<1x128xf32>
    %72 = arith.addf %68, %71 : vector<1x128xf32>
    %c0_42 = arith.constant 0 : index
    %c0_43 = arith.constant 0 : index
    %73 = vector.load %arg7[%c0_42, %c0_43] : memref<1x128xf32, #tpu.memory_space<vmem>>, vector<1x128xf32>
    tpu.vector_store %arg7[%c0_42, %c0_43], %72 {strides = array<i32>} : memref<1x128xf32, #tpu.memory_space<vmem>>, vector<1x128xf32>,
    return
  }
  func.func @transform_0(%arg0: i32, %arg1: i32) -> (i32, i32, i32) {
    %c0_i32 = arith.constant 0 : i32
    %c0_i32_0 = arith.constant 0 : i32
    %c0_i32_1 = arith.constant 0 : i32
    return %arg0, %c0_i32, %c0_i32_0 : i32, i32, i32
  }
  func.func @transform_1(%arg0: i32, %arg1: i32) -> (i32, i32, i32) {
    %c0_i32 = arith.constant 0 : i32
    %c0_i32_0 = arith.constant 0 : i32
    %c0_i32_1 = arith.constant 0 : i32
    %c0_i32_2 = arith.constant 0 : i32
    return %c0_i32, %c0_i32_0, %c0_i32_1 : i32, i32, i32
  }
  func.func @transform_2(%arg0: i32, %arg1: i32) -> (i32, i32) {
    %c0_i32 = arith.constant 0 : i32
    %c0_i32_0 = arith.constant 0 : i32
    %c0_i32_1 = arith.constant 0 : i32
    return %c0_i32, %c0_i32_0 : i32, i32
  }
  func.func @transform_3(%arg0: i32, %arg1: i32) -> (i32, i32) {
    %c1_i32 = arith.constant 1 : i32
    %0 = arith.muli %arg0, %c1_i32 : i32
    %1 = arith.addi %0, %arg1 : i32
    %c0_i32 = arith.constant 0 : i32
    %c0_i32_0 = arith.constant 0 : i32
    return %1, %c0_i32 : i32, i32
  }
  func.func @transform_4(%arg0: i32, %arg1: i32) -> (i32, i32) {
    %c0_i32 = arith.constant 0 : i32
    %c0_i32_0 = arith.constant 0 : i32
    %c0_i32_1 = arith.constant 0 : i32
    return %c0_i32, %c0_i32_0 : i32, i32
  }
  func.func @transform_5(%arg0: i32, %arg1: i32) -> (i32, i32) {
    %c0_i32 = arith.constant 0 : i32
    %c0_i32_0 = arith.constant 0 : i32
    %c0_i32_1 = arith.constant 0 : i32
    return %c0_i32, %c0_i32_0 : i32, i32
  }
}

</mosaic_0001>

<llo_original>
// kernel: tpu_custom_call.1
$region0: #{tpu_custom_call.1}
  #allocation0 [shape = 'u32[]', space=smem, size = 0x4, offset = 0x4, fixed_abs, tag = 'smem constant byte address 0x4 - core index']
  #allocation1 [shape = 'u32[144,128]{1,0:T(1,128)}', space=vmem, size = 0x12000, scoped, tag = 'internal scratch']
  %s0 = inlined_call_operand.vmem [shape: f32[2,20,8], index: 0, kind: input, shape index: {}]
  %s1 = inlined_call_operand.vmem [shape: f32[5,8,128], index: 1, kind: input, shape index: {}]
  %s2 = inlined_call_operand.vmem [shape: f32[1,128], index: 2, kind: input, shape index: {}]
  %s3 = inlined_call_operand.hbm [shape: f32[32,128], index: 3, kind: output, shape index: {0}]
  %s4 = inlined_call_operand.hbm [shape: f32[1,128], index: 4, kind: output, shape index: {1}]
  %s5 = inlined_call_operand.hbm [shape: f32[1,128], index: 5, kind: output, shape index: {2}]
  %6 = xla_tuple %s3, %s4, %s5
  %s7 = sld [smem:[#allocation0]]
  $region65: #{tpu_custom_call.1} parent=0
    _
  %s9 = ssub.s32 1, %s7
  %s10 = scalar_select 0, %s9, %s7
  $region1: #{tpu_custom_call.1} parent=0
    #allocation2 [shape = 'u8[16384]{0}', space=vmem, size = 0x4000, scoped, tag = 'output window, operand 0']
    #allocation3 [shape = 's32[2]{0}', space=sflag, size = 0x8, scoped, tag = 'scoped memory for tpu_custom_call.1']
    #allocation4 [shape = 'u8[512]{0}', space=vmem, size = 0x400, scoped, tag = 'output window, operand 1, single buffered']
    #allocation5 [shape = 's32[1]{0}', space=sflag, size = 0x4, scoped, tag = 'scoped memory for tpu_custom_call.1']
    #allocation6 [shape = 'u8[512]{0}', space=vmem, size = 0x400, scoped, tag = 'output window, operand 2, single buffered']
    %11 = vsyncpa [#allocation3], 0
    %s12 = scalar_lea.sflag [#allocation3], 1
    %13 = vsyncpa %s12, 0
    %14 = vsyncpa [#allocation5], 0
    loop: start=0, step=1, limit=4
    $region2: #{tpu_custom_call.1} parent=1 // loop_pre_header
      _
    $region3: #{tpu_custom_call.1} parent=1 // loop_header
      %s16 = sphi 0, %s20
      %p17 = scmp.ge.s32.totalorder %s16, 4
      %s23 = sphi 0, %s35
      %s24 = sphi 0, %s31
      %s25 = sphi 0, %s23
      %s26 = sphi 0, %s24
      %s27 = sphi 0, %s25
      %s28 = sphi 0, %s26
      %s38 = sphi 0, %s40
      %s41 = sphi 0, %s38
      %s42 = sphi 0, %s41
      %s58 = sphi 0, %s42
      %s62 = sphi 0, %s62
      %s64 = sphi 0, %s62
      %s65 = sphi 0, %s64
      %s79 = sphi 0, %s65
      %s83 = sphi 0, %s83
      %s85 = sphi 0, %s83
      %s86 = sphi 0, %s85
      %s100 = sphi 0, %s86
      %s108 = sphi 0, %s110
      %s111 = sphi 0, %s108
      %s112 = sphi 0, %s111
      %s128 = sphi 0, %s112
      %s132 = sphi 0, %s132
      %s134 = sphi 0, %s132
      %s135 = sphi 0, %s134
      %s149 = sphi 0, %s135
      %s153 = sphi 0, %s153
      %s155 = sphi 0, %s153
      %s156 = sphi 0, %s155
      %s170 = sphi 0, %s156
    $region4: #{tpu_custom_call.1} parent=1 // loop_header_branch
      %19 = sbr.rel (%p17) target = $region8
    $region5: #{tpu_custom_call.1} parent=1 // loop_body
      %s21 = ssub.s32 %s16, 1
      %s22 = ssub.s32 %s16, 2
      %s29 = sadd.s32 1, %s24
      %p30 = scmp.ge.s32.totalorder %s29, 1
      %s31 = scalar_select %p30, 0, %s29
      %s32 = sadd.s32 1, %s23
      %s33 = scalar_select %p30, %s32, %s23
      %p34 = scmp.ge.s32.totalorder %s33, 2
      %s35 = scalar_select %p34, 0, %s33
      %s36 = ssub.s32 %s23, %s35
      %p37 = scmp.eq.s32.totalorder %s36, 0
      %s39 = sadd.s32 %s38, 1
      %s40 = scalar_select %p37, %s38, %s39
      %p43 = pneg %p37
      %p44 = scmp.eq.s32.totalorder %s16, 1
      %p45 = por %p43, %p44
      %p46 = scmp.ne.s32.totalorder %s38, %s41
      %p47 = scmp.eq.s32.totalorder %s16, 0
      %p48 = por %p46, %p47
      %p49 = scmp.ne.s32.totalorder %s38, %s41
      %p50 = scmp.eq.s32.totalorder %s21, 1
      %p51 = por %p49, %p50
      %p52 = scmp.ne.s32.totalorder %s41, %s42
      %p53 = scmp.eq.s32.totalorder %s21, 0
      %p54 = por %p52, %p53
      %p55 = scmp.ne.s32.totalorder %s41, %s42
      %p56 = scmp.eq.s32.totalorder %s22, 1
      %p57 = por %p55, %p56
      %p59 = scmp.ne.s32.totalorder %s42, %s58
      %p60 = scmp.eq.s32.totalorder %s22, 0
      %p61 = por %p59, %p60
      %s63 = sadd.s32 %s62, 1
      %p66 = scmp.eq.s32.totalorder %s16, 1
      %p67 = scmp.ne.s32.totalorder %s62, %s64
      %p68 = scmp.eq.s32.totalorder %s16, 0
      %p69 = por %p67, %p68
      %p70 = scmp.ne.s32.totalorder %s62, %s64
      %p71 = scmp.eq.s32.totalorder %s21, 1
      %p72 = por %p70, %p71
      %p73 = scmp.ne.s32.totalorder %s64, %s65
      %p74 = scmp.eq.s32.totalorder %s21, 0
      %p75 = por %p73, %p74
      %p76 = scmp.ne.s32.totalorder %s64, %s65
      %p77 = scmp.eq.s32.totalorder %s22, 1
      %p78 = por %p76, %p77
      %p80 = scmp.ne.s32.totalorder %s65, %s79
      %p81 = scmp.eq.s32.totalorder %s22, 0
      %p82 = por %p80, %p81
      %s84 = sadd.s32 %s83, 1
      %p87 = scmp.eq.s32.totalorder %s16, 1
      %p88 = scmp.ne.s32.totalorder %s83, %s85
      %p89 = scmp.eq.s32.totalorder %s16, 0
      %p90 = por %p88, %p89
      %p91 = scmp.ne.s32.totalorder %s83, %s85
      %p92 = scmp.eq.s32.totalorder %s21, 1
      %p93 = por %p91, %p92
      %p94 = scmp.ne.s32.totalorder %s85, %s86
      %p95 = scmp.eq.s32.totalorder %s21, 0
      %p96 = por %p94, %p95
      %p97 = scmp.ne.s32.totalorder %s85, %s86
      %p98 = scmp.eq.s32.totalorder %s22, 1
      %p99 = por %p97, %p98
      %p101 = scmp.ne.s32.totalorder %s86, %s100
      %p102 = scmp.eq.s32.totalorder %s22, 0
      %p103 = por %p101, %p102
      %s104 = sadd.s32 %s23, %s24
      %s105 = sadd.s32 %s35, %s31
      %s106 = ssub.s32 %s104, %s105
      %p107 = scmp.eq.s32.totalorder %s106, 0
      %s109 = sadd.s32 %s108, 1
      %s110 = scalar_select %p107, %s108, %s109
      %p113 = pneg %p107
      %p114 = scmp.eq.s32.totalorder %s16, 1
      %p115 = por %p113, %p114
      %p116 = scmp.ne.s32.totalorder %s108, %s111
      %p117 = scmp.eq.s32.totalorder %s16, 0
      %p118 = por %p116, %p117
      %p119 = scmp.ne.s32.totalorder %s108, %s111
      %p120 = scmp.eq.s32.totalorder %s21, 1
      %p121 = por %p119, %p120
      %p122 = scmp.ne.s32.totalorder %s111, %s112
      %p123 = scmp.eq.s32.totalorder %s21, 0
      %p124 = por %p122, %p123
      %p125 = scmp.ne.s32.totalorder %s111, %s112
      %p126 = scmp.eq.s32.totalorder %s22, 1
      %p127 = por %p125, %p126
      %p129 = scmp.ne.s32.totalorder %s112, %s128
      %p130 = scmp.eq.s32.totalorder %s22, 0
      %p131 = por %p129, %p130
      %s133 = sadd.s32 %s132, 1
      %p136 = scmp.eq.s32.totalorder %s16, 1
      %p137 = scmp.ne.s32.totalorder %s132, %s134
      %p138 = scmp.eq.s32.totalorder %s16, 0
      %p139 = por %p137, %p138
      %p140 = scmp.ne.s32.totalorder %s132, %s134
      %p141 = scmp.eq.s32.totalorder %s21, 1
      %p142 = por %p140, %p141
      %p143 = scmp.ne.s32.totalorder %s134, %s135
      %p144 = scmp.eq.s32.totalorder %s21, 0
      %p145 = por %p143, %p144
      %p146 = scmp.ne.s32.totalorder %s134, %s135
      %p147 = scmp.eq.s32.totalorder %s22, 1
      %p148 = por %p146, %p147
      %p150 = scmp.ne.s32.totalorder %s135, %s149
      %p151 = scmp.eq.s32.totalorder %s22, 0
      %p152 = por %p150, %p151
      %s154 = sadd.s32 %s153, 1
      %p157 = scmp.eq.s32.totalorder %s16, 1
      %p158 = scmp.ne.s32.totalorder %s153, %s155
      %p159 = scmp.eq.s32.totalorder %s16, 0
      %p160 = por %p158, %p159
      %p161 = scmp.ne.s32.totalorder %s153, %s155
      %p162 = scmp.eq.s32.totalorder %s21, 1
      %p163 = por %p161, %p162
      %p164 = scmp.ne.s32.totalorder %s155, %s156
      %p165 = scmp.eq.s32.totalorder %s21, 0
      %p166 = por %p164, %p165
      %p167 = scmp.ne.s32.totalorder %s155, %s156
      %p168 = scmp.eq.s32.totalorder %s22, 1
      %p169 = por %p167, %p168
      %p171 = scmp.ne.s32.totalorder %s156, %s170
      %p172 = scmp.eq.s32.totalorder %s22, 0
      %p173 = por %p171, %p172
      %p174 = scmp.le.s32.totalorder 1, %s16
      %p175 = scmp.lt.s32.totalorder %s16, 3
      %p176 = pnand %p174, %p175
      %p177 = pneg %p176
      // Predicated region
      $region9: #{tpu_custom_call.1} parent=5 // pred_check
        _
      $region10: #{tpu_custom_call.1} parent=5 // pred_check_branch
        %179 = sbr.rel (%p176) target = $region12
      $region11: #{tpu_custom_call.1} parent=5 // pred_region
        %s180 = ssub.s32 %s16, 1
        // Predicated region
        $region13: #{tpu_custom_call.1} parent=11 // pred_check
          %p181 = pneg %p75
        $region14: #{tpu_custom_call.1} parent=11 // pred_check_branch
          %183 = sbr.rel (%p181) target = $region16
        $region15: #{tpu_custom_call.1} parent=11 // pred_region
          _
        $region16: #{tpu_custom_call.1} parent=11 // pred_fallthru
          _
        // Predicated region
        $region17: #{tpu_custom_call.1} parent=11 // pred_check
          %p184 = pneg %p96
        $region18: #{tpu_custom_call.1} parent=11 // pred_check_branch
          %186 = sbr.rel (%p184) target = $region20
        $region19: #{tpu_custom_call.1} parent=11 // pred_region
          _
        $region20: #{tpu_custom_call.1} parent=11 // pred_fallthru
          _
      $region12: #{tpu_custom_call.1} parent=5 // pred_fallthru
        _
      %p187 = scmp.lt.s32.totalorder %s16, 2
      // Predicated region
      $region21: #{tpu_custom_call.1} parent=5 // pred_check
        %p188 = pneg %p187
      $region22: #{tpu_custom_call.1} parent=5 // pred_check_branch
        %190 = sbr.rel (%p188) target = $region24
      $region23: #{tpu_custom_call.1} parent=5 // pred_region
        // Predicated region
        $region25: #{tpu_custom_call.1} parent=23 // pred_check
          %p191 = pneg %p48
        $region26: #{tpu_custom_call.1} parent=23 // pred_check_branch
          %193 = sbr.rel (%p191) target = $region28
        $region27: #{tpu_custom_call.1} parent=23 // pred_region
          %p194 = scmp.lt.s32.totalorder %s23, 1
          %s195 = scalar_select %p194, %s23, 1
          %s196 = smul.addr %s195, 3
          %s197 = smul.addr %s196, 8
          %s198 = scalar_lea.vmem %s0, %s197
        $region28: #{tpu_custom_call.1} parent=23 // pred_fallthru
          _
      $region24: #{tpu_custom_call.1} parent=5 // pred_fallthru
        _
      %p199 = scmp.le.s32.totalorder 1, %s16
      %p200 = scmp.lt.s32.totalorder %s16, 3
      %p201 = pnand %p199, %p200
      %p202 = pneg %p201
      // Predicated region
      $region29: #{tpu_custom_call.1} parent=5 // pred_check
        _
      $region30: #{tpu_custom_call.1} parent=5 // pred_check_branch
        %204 = sbr.rel (%p201) target = $region32
      $region31: #{tpu_custom_call.1} parent=5 // pred_region
        %s205 = ssub.s32 %s16, 1
        %p206 = scmp.lt.s32.totalorder %s25, 1
        %s207 = scalar_select %p206, %s25, 1
        %s208 = smul.addr %s207, 3
        %s209 = smul.addr %s208, 8
        %s210 = scalar_lea.vmem %s0, %s209
        %p211 = pneg %p54
        %p212 = pneg %p51
        %p213 = pneg %p75
        %p214 = pneg %p72
        %p215 = pneg %p96
        %p216 = pneg %p93
        %p217 = pneg %p124
        %p218 = pneg %p121
        %s219 = sand.u32 %s111, 1
        %s220 = scalar_lea.sflag [#allocation3], %s219
        %s221 = sand.u32 %s111, 1
        %s222 = smul.addr %s221, 16
        %s223 = scalar_lea.vmem [#allocation2], %s222
        %p224 = pneg %p145
        %p225 = pneg %p142
        %p226 = pneg %p166
        %p227 = pneg %p163
        %p228 = scmp.lt.s32.totalorder %s25, 1
        %s229 = scalar_select %p228, %s25, 1
        %s230 = smul.addr %s229, 3
        %s231 = smul.addr %s230, 8
        %s232 = scalar_lea.vmem %s0, %s231
        %s233 = sadd.s32 %s25, %s26
        %s234 = smul.u32 2, %s233
        %p235 = scmp.eq.s32.totalorder %s25, 0
        %p236 = scmp.eq.s32.totalorder %s26, 0
        %p237 = pnand %p235, %p236
        %p238 = pneg %p237
        // Predicated region
        $region33: #{tpu_custom_call.1} parent=31 // pred_check
          _
        $region34: #{tpu_custom_call.1} parent=31 // pred_check_branch
          %240 = sbr.rel (%p237) target = $region36
        $region35: #{tpu_custom_call.1} parent=31 // pred_region
          %241 = vst [vmem:[#allocation4] sm:$0x1] 0.0
          %242 = vst [vmem:[#allocation6] sm:$0x1] 0.0
        $region36: #{tpu_custom_call.1} parent=31 // pred_fallthru
          _
        %s243 = smul.u32 %s26, 16
        %s244 = scalar_lea.vmem %s232, %s243
        %v245 = vld [vmem:[%s244] sm:$0xff]
        %v246 = vld [vmem:[%s244 + $0x8] sm:$0xff]
        %v247 = vld [vmem:[%s1] sm:$0xff]
        %s248 = sadd.s32 %s243, 1
        %s249 = scalar_lea.vmem %s232, %s248
        %v250 = vld [vmem:[%s249] sm:$0xff]
        %v251 = vld [vmem:[%s249 + $0x8] sm:$0xff]
        %s252 = scalar_lea.vmem %s1, 8
        %v253 = vld [vmem:[%s252] sm:$0xff]
        %vm254 = vcmask 64512
        %v256 = vsel %vm254, %v250, 0
        %v259 = vsel %vm254, %v251, 0
        %261 = vmatprep.subr.mxu0 0.0
        %262 = vmatpush1.msra.mxu0 %v253
        %263 = vmatprep.subr.mxu0 0.0
        %264 = vmatpush1.msra.mxu0 0.0
        %265 = vmatprep.subr.mxu0 0.0
        %266 = vmatpush1.msra.mxu0 0.0
        %267 = vmatprep.subr.mxu0 0.0
        %268 = vmatpush1.msra.mxu0 0.0
        %269 = vmatprep.subr.mxu0 0.0
        %270 = vmatpush1.msra.mxu0 0.0
        %271 = vmatprep.subr.mxu0 0.0
        %272 = vmatpush1.msra.mxu0 0.0
        %273 = vmatprep.subr.mxu0 0.0
        %274 = vmatpush1.msra.mxu0 0.0
        %275 = vmatprep.subr.mxu0 0.0
        %276 = vmatpush1.msra.mxu0 0.0
        %277 = vmatprep.subr.mxu0 0.0
        %278 = vmatpush1.msra.mxu0 0.0
        %279 = vmatprep.subr.mxu0 0.0
        %280 = vmatpush1.msra.mxu0 0.0
        %281 = vmatprep.subr.mxu0 0.0
        %282 = vmatpush1.msra.mxu0 0.0
        %283 = vmatprep.subr.mxu0 0.0
        %284 = vmatpush1.msra.mxu0 0.0
        %285 = vmatprep.subr.mxu0 0.0
        %286 = vmatpush1.msra.mxu0 0.0
        %287 = vmatprep.subr.mxu0 0.0
        %288 = vmatpush1.msra.mxu0 0.0
        %289 = vmatprep.subr.mxu0 0.0
        %290 = vmatpush1.msra.mxu0 0.0
        %291 = vmatprep.subr.mxu0 0.0
        %292 = vmatpush1.msra.mxu0 0.0
        %293 = vmatprep.subr.mxu0 0.0
        %294 = vmatpush1.msra.mxu0 0.0
        %295 = vmatprep.subr.mxu0 0.0
        %296 = vmatpush1.msra.mxu0 0.0
        %297 = vmatprep.subr.mxu0 0.0
        %298 = vmatpush1.msra.mxu0 0.0
        %299 = vmatprep.subr.mxu0 0.0
        %300 = vmatpush1.msra.mxu0 0.0
        %301 = vmatprep.subr.mxu0 0.0
        %302 = vmatpush1.msra.mxu0 0.0
        %303 = vmatprep.subr.mxu0 0.0
        %304 = vmatpush1.msra.mxu0 0.0
        %305 = vmatprep.subr.mxu0 0.0
        %306 = vmatpush1.msra.mxu0 0.0
        %307 = vmatprep.subr.mxu0 0.0
        %308 = vmatpush1.msra.mxu0 0.0
        %309 = vmatprep.subr.mxu0 0.0
        %310 = vmatpush1.msra.mxu0 0.0
        %311 = vmatprep.subr.mxu0 0.0
        %312 = vmatpush1.msra.mxu0 0.0
        %313 = vmatprep.subr.mxu0 0.0
        %314 = vmatpush1.msra.mxu0 0.0
        %315 = vmatprep.subr.mxu0 0.0
        %316 = vmatpush1.msra.mxu0 0.0
        %317 = vmatprep.subr.mxu0 0.0
        %318 = vmatpush1.msra.mxu0 0.0
        %319 = vmatprep.subr.mxu0 0.0
        %320 = vmatpush1.msra.mxu0 0.0
        %321 = vmatprep.subr.mxu0 0.0
        %322 = vmatpush1.msra.mxu0 0.0
        %323 = vmatprep.subr.mxu0 0.0
        %324 = vmatpush1.msra.mxu0 0.0
        %325 = vmatprep.mubr.f32.mxu0 0.0
        %326 = vmatmul.mubr.f32.gmra.mrb[0].mxu0 %v256
        %v327 = vpop.f32.mrb[0].mxu0
        %v328 = vadd.f32 0.0, %v327
        %v329 = vpop.f32.mrb[0].mxu0
        %330 = vmatprep.mubr.f32.mxu0 0.0
        %331 = vmatmul.mubr.f32.gmra.mrb[0].mxu0 %v259
        %v332 = vpop.f32.mrb[0].mxu0
        %v333 = vadd.f32 0.0, %v332
        %v334 = vpop.f32.mrb[0].mxu0
        %335 = vdwg.mxu0
        %v337 = vsel %vm254, %v245, 0
        %v340 = vsel %vm254, %v246, 0
        %342 = vmatprep.subr.mxu0 0.0
        %343 = vmatpush1.msra.mxu0 %v247
        %344 = vmatprep.subr.mxu0 0.0
        %345 = vmatpush1.msra.mxu0 0.0
        %346 = vmatprep.subr.mxu0 0.0
        %347 = vmatpush1.msra.mxu0 0.0
        %348 = vmatprep.subr.mxu0 0.0
        %349 = vmatpush1.msra.mxu0 0.0
        %350 = vmatprep.subr.mxu0 0.0
        %351 = vmatpush1.msra.mxu0 0.0
        %352 = vmatprep.subr.mxu0 0.0
        %353 = vmatpush1.msra.mxu0 0.0
        %354 = vmatprep.subr.mxu0 0.0
        %355 = vmatpush1.msra.mxu0 0.0
        %356 = vmatprep.subr.mxu0 0.0
        %357 = vmatpush1.msra.mxu0 0.0
        %358 = vmatprep.subr.mxu0 0.0
        %359 = vmatpush1.msra.mxu0 0.0
        %360 = vmatprep.subr.mxu0 0.0
        %361 = vmatpush1.msra.mxu0 0.0
        %362 = vmatprep.subr.mxu0 0.0
        %363 = vmatpush1.msra.mxu0 0.0
        %364 = vmatprep.subr.mxu0 0.0
        %365 = vmatpush1.msra.mxu0 0.0
        %366 = vmatprep.subr.mxu0 0.0
        %367 = vmatpush1.msra.mxu0 0.0
        %368 = vmatprep.subr.mxu0 0.0
        %369 = vmatpush1.msra.mxu0 0.0
        %370 = vmatprep.subr.mxu0 0.0
        %371 = vmatpush1.msra.mxu0 0.0
        %372 = vmatprep.subr.mxu0 0.0
        %373 = vmatpush1.msra.mxu0 0.0
        %374 = vmatprep.subr.mxu0 0.0
        %375 = vmatpush1.msra.mxu0 0.0
        %376 = vmatprep.subr.mxu0 0.0
        %377 = vmatpush1.msra.mxu0 0.0
        %378 = vmatprep.subr.mxu0 0.0
        %379 = vmatpush1.msra.mxu0 0.0
        %380 = vmatprep.subr.mxu0 0.0
        %381 = vmatpush1.msra.mxu0 0.0
        %382 = vmatprep.subr.mxu0 0.0
        %383 = vmatpush1.msra.mxu0 0.0
        %384 = vmatprep.subr.mxu0 0.0
        %385 = vmatpush1.msra.mxu0 0.0
        %386 = vmatprep.subr.mxu0 0.0
        %387 = vmatpush1.msra.mxu0 0.0
        %388 = vmatprep.subr.mxu0 0.0
        %389 = vmatpush1.msra.mxu0 0.0
        %390 = vmatprep.subr.mxu0 0.0
        %391 = vmatpush1.msra.mxu0 0.0
        %392 = vmatprep.subr.mxu0 0.0
        %393 = vmatpush1.msra.mxu0 0.0
        %394 = vmatprep.subr.mxu0 0.0
        %395 = vmatpush1.msra.mxu0 0.0
        %396 = vmatprep.subr.mxu0 0.0
        %397 = vmatpush1.msra.mxu0 0.0
        %398 = vmatprep.subr.mxu0 0.0
        %399 = vmatpush1.msra.mxu0 0.0
        %400 = vmatprep.subr.mxu0 0.0
        %401 = vmatpush1.msra.mxu0 0.0
        %402 = vmatprep.subr.mxu0 0.0
        %403 = vmatpush1.msra.mxu0 0.0
        %404 = vmatprep.subr.mxu0 0.0
        %405 = vmatpush1.msra.mxu0 0.0
        %406 = vmatprep.mubr.f32.mxu0 0.0
        %407 = vmatmul.mubr.f32.gmra.mrb[0].mxu0 %v337
        %v408 = vpop.f32.mrb[0].mxu0
        %v409 = vadd.f32 %v328, %v408
        %v410 = vpop.f32.mrb[0].mxu0
        %411 = vmatprep.mubr.f32.mxu0 0.0
        %412 = vmatmul.mubr.f32.gmra.mrb[0].mxu0 %v340
        %v413 = vpop.f32.mrb[0].mxu0
        %v414 = vadd.f32 %v333, %v413
        %v415 = vpop.f32.mrb[0].mxu0
        %416 = vdwg.mxu0
        %s417 = sadd.s32 %s243, 2
        %s418 = scalar_lea.vmem %s232, %s417
        %v419 = vld [vmem:[%s418] sm:$0xff]
        %v420 = vld [vmem:[%s418 + $0x8] sm:$0xff]
        %s421 = scalar_lea.vmem %s1, 16
        %v422 = vld [vmem:[%s421] sm:$0xff]
        %v424 = vsel %vm254, %v419, 0
        %v427 = vsel %vm254, %v420, 0
        %429 = vmatprep.subr.mxu0 0.0
        %430 = vmatpush1.msra.mxu0 %v422
        %431 = vmatprep.subr.mxu0 0.0
        %432 = vmatpush1.msra.mxu0 0.0
        %433 = vmatprep.subr.mxu0 0.0
        %434 = vmatpush1.msra.mxu0 0.0
        %435 = vmatprep.subr.mxu0 0.0
        %436 = vmatpush1.msra.mxu0 0.0
        %437 = vmatprep.subr.mxu0 0.0
        %438 = vmatpush1.msra.mxu0 0.0
        %439 = vmatprep.subr.mxu0 0.0
        %440 = vmatpush1.msra.mxu0 0.0
        %441 = vmatprep.subr.mxu0 0.0
        %442 = vmatpush1.msra.mxu0 0.0
        %443 = vmatprep.subr.mxu0 0.0
        %444 = vmatpush1.msra.mxu0 0.0
        %445 = vmatprep.subr.mxu0 0.0
        %446 = vmatpush1.msra.mxu0 0.0
        %447 = vmatprep.subr.mxu0 0.0
        %448 = vmatpush1.msra.mxu0 0.0
        %449 = vmatprep.subr.mxu0 0.0
        %450 = vmatpush1.msra.mxu0 0.0
        %451 = vmatprep.subr.mxu0 0.0
        %452 = vmatpush1.msra.mxu0 0.0
        %453 = vmatprep.subr.mxu0 0.0
        %454 = vmatpush1.msra.mxu0 0.0
        %455 = vmatprep.subr.mxu0 0.0
        %456 = vmatpush1.msra.mxu0 0.0
        %457 = vmatprep.subr.mxu0 0.0
        %458 = vmatpush1.msra.mxu0 0.0
        %459 = vmatprep.subr.mxu0 0.0
        %460 = vmatpush1.msra.mxu0 0.0
        %461 = vmatprep.subr.mxu0 0.0
        %462 = vmatpush1.msra.mxu0 0.0
        %463 = vmatprep.subr.mxu0 0.0
        %464 = vmatpush1.msra.mxu0 0.0
        %465 = vmatprep.subr.mxu0 0.0
        %466 = vmatpush1.msra.mxu0 0.0
        %467 = vmatprep.subr.mxu0 0.0
        %468 = vmatpush1.msra.mxu0 0.0
        %469 = vmatprep.subr.mxu0 0.0
        %470 = vmatpush1.msra.mxu0 0.0
        %471 = vmatprep.subr.mxu0 0.0
        %472 = vmatpush1.msra.mxu0 0.0
        %473 = vmatprep.subr.mxu0 0.0
        %474 = vmatpush1.msra.mxu0 0.0
        %475 = vmatprep.subr.mxu0 0.0
        %476 = vmatpush1.msra.mxu0 0.0
        %477 = vmatprep.subr.mxu0 0.0
        %478 = vmatpush1.msra.mxu0 0.0
        %479 = vmatprep.subr.mxu0 0.0
        %480 = vmatpush1.msra.mxu0 0.0
        %481 = vmatprep.subr.mxu0 0.0
        %482 = vmatpush1.msra.mxu0 0.0
        %483 = vmatprep.subr.mxu0 0.0
        %484 = vmatpush1.msra.mxu0 0.0
        %485 = vmatprep.subr.mxu0 0.0
        %486 = vmatpush1.msra.mxu0 0.0
        %487 = vmatprep.subr.mxu0 0.0
        %488 = vmatpush1.msra.mxu0 0.0
        %489 = vmatprep.subr.mxu0 0.0
        %490 = vmatpush1.msra.mxu0 0.0
        %491 = vmatprep.subr.mxu0 0.0
        %492 = vmatpush1.msra.mxu0 0.0
        %493 = vmatprep.mubr.f32.mxu0 0.0
        %494 = vmatmul.mubr.f32.gmra.mrb[0].mxu0 %v424
        %v495 = vpop.f32.mrb[0].mxu0
        %v496 = vadd.f32 0.0, %v495
        %v497 = vpop.f32.mrb[0].mxu0
        %498 = vmatprep.mubr.f32.mxu0 0.0
        %499 = vmatmul.mubr.f32.gmra.mrb[0].mxu0 %v427
        %v500 = vpop.f32.mrb[0].mxu0
        %v501 = vadd.f32 0.0, %v500
        %v502 = vpop.f32.mrb[0].mxu0
        %503 = vdwg.mxu0
        %v504 = vadd.f32 %v409, %v496
        %v505 = vadd.f32 %v414, %v501
        %s506 = sadd.s32 %s243, 3
        %s507 = scalar_lea.vmem %s232, %s506
        %v508 = vld [vmem:[%s507] sm:$0xff]
        %v509 = vld [vmem:[%s507 + $0x8] sm:$0xff]
        %s510 = scalar_lea.vmem %s1, 24
        %v511 = vld [vmem:[%s510] sm:$0xff]
        %v513 = vsel %vm254, %v508, 0
        %v516 = vsel %vm254, %v509, 0
        %518 = vmatprep.subr.mxu0 0.0
        %519 = vmatpush1.msra.mxu0 %v511
        %520 = vmatprep.subr.mxu0 0.0
        %521 = vmatpush1.msra.mxu0 0.0
        %522 = vmatprep.subr.mxu0 0.0
        %523 = vmatpush1.msra.mxu0 0.0
        %524 = vmatprep.subr.mxu0 0.0
        %525 = vmatpush1.msra.mxu0 0.0
        %526 = vmatprep.subr.mxu0 0.0
        %527 = vmatpush1.msra.mxu0 0.0
        %528 = vmatprep.subr.mxu0 0.0
        %529 = vmatpush1.msra.mxu0 0.0
        %530 = vmatprep.subr.mxu0 0.0
        %531 = vmatpush1.msra.mxu0 0.0
        %532 = vmatprep.subr.mxu0 0.0
        %533 = vmatpush1.msra.mxu0 0.0
        %534 = vmatprep.subr.mxu0 0.0
        %535 = vmatpush1.msra.mxu0 0.0
        %536 = vmatprep.subr.mxu0 0.0
        %537 = vmatpush1.msra.mxu0 0.0
        %538 = vmatprep.subr.mxu0 0.0
        %539 = vmatpush1.msra.mxu0 0.0
        %540 = vmatprep.subr.mxu0 0.0
        %541 = vmatpush1.msra.mxu0 0.0
        %542 = vmatprep.subr.mxu0 0.0
        %543 = vmatpush1.msra.mxu0 0.0
        %544 = vmatprep.subr.mxu0 0.0
        %545 = vmatpush1.msra.mxu0 0.0
        %546 = vmatprep.subr.mxu0 0.0
        %547 = vmatpush1.msra.mxu0 0.0
        %548 = vmatprep.subr.mxu0 0.0
        %549 = vmatpush1.msra.mxu0 0.0
        %550 = vmatprep.subr.mxu0 0.0
        %551 = vmatpush1.msra.mxu0 0.0
        %552 = vmatprep.subr.mxu0 0.0
        %553 = vmatpush1.msra.mxu0 0.0
        %554 = vmatprep.subr.mxu0 0.0
        %555 = vmatpush1.msra.mxu0 0.0
        %556 = vmatprep.subr.mxu0 0.0
        %557 = vmatpush1.msra.mxu0 0.0
        %558 = vmatprep.subr.mxu0 0.0
        %559 = vmatpush1.msra.mxu0 0.0
        %560 = vmatprep.subr.mxu0 0.0
        %561 = vmatpush1.msra.mxu0 0.0
        %562 = vmatprep.subr.mxu0 0.0
        %563 = vmatpush1.msra.mxu0 0.0
        %564 = vmatprep.subr.mxu0 0.0
        %565 = vmatpush1.msra.mxu0 0.0
        %566 = vmatprep.subr.mxu0 0.0
        %567 = vmatpush1.msra.mxu0 0.0
        %568 = vmatprep.subr.mxu0 0.0
        %569 = vmatpush1.msra.mxu0 0.0
        %570 = vmatprep.subr.mxu0 0.0
        %571 = vmatpush1.msra.mxu0 0.0
        %572 = vmatprep.subr.mxu0 0.0
        %573 = vmatpush1.msra.mxu0 0.0
        %574 = vmatprep.subr.mxu0 0.0
        %575 = vmatpush1.msra.mxu0 0.0
        %576 = vmatprep.subr.mxu0 0.0
        %577 = vmatpush1.msra.mxu0 0.0
        %578 = vmatprep.subr.mxu0 0.0
        %579 = vmatpush1.msra.mxu0 0.0
        %580 = vmatprep.subr.mxu0 0.0
        %581 = vmatpush1.msra.mxu0 0.0
        %582 = vmatprep.mubr.f32.mxu0 0.0
        %583 = vmatmul.mubr.f32.gmra.mrb[0].mxu0 %v513
        %v584 = vpop.f32.mrb[0].mxu0
        %v585 = vadd.f32 0.0, %v584
        %v586 = vpop.f32.mrb[0].mxu0
        %587 = vmatprep.mubr.f32.mxu0 0.0
        %588 = vmatmul.mubr.f32.gmra.mrb[0].mxu0 %v516
        %v589 = vpop.f32.mrb[0].mxu0
        %v590 = vadd.f32 0.0, %v589
        %v591 = vpop.f32.mrb[0].mxu0
        %592 = vdwg.mxu0
        %v593 = vadd.f32 %v504, %v585
        %v594 = vadd.f32 %v505, %v590
        %s595 = sadd.s32 %s243, 4
        %s596 = scalar_lea.vmem %s232, %s595
        %v597 = vld [vmem:[%s596] sm:$0xff]
        %v598 = vld [vmem:[%s596 + $0x8] sm:$0xff]
        %s599 = scalar_lea.vmem %s1, 32
        %v600 = vld [vmem:[%s599] sm:$0xff]
        %v602 = vsel %vm254, %v597, 0
        %v605 = vsel %vm254, %v598, 0
        %607 = vmatprep.subr.mxu0 0.0
        %608 = vmatpush1.msra.mxu0 %v600
        %609 = vmatprep.subr.mxu0 0.0
        %610 = vmatpush1.msra.mxu0 0.0
        %611 = vmatprep.subr.mxu0 0.0
        %612 = vmatpush1.msra.mxu0 0.0
        %613 = vmatprep.subr.mxu0 0.0
        %614 = vmatpush1.msra.mxu0 0.0
        %615 = vmatprep.subr.mxu0 0.0
        %616 = vmatpush1.msra.mxu0 0.0
        %617 = vmatprep.subr.mxu0 0.0
        %618 = vmatpush1.msra.mxu0 0.0
        %619 = vmatprep.subr.mxu0 0.0
        %620 = vmatpush1.msra.mxu0 0.0
        %621 = vmatprep.subr.mxu0 0.0
        %622 = vmatpush1.msra.mxu0 0.0
        %623 = vmatprep.subr.mxu0 0.0
        %624 = vmatpush1.msra.mxu0 0.0
        %625 = vmatprep.subr.mxu0 0.0
        %626 = vmatpush1.msra.mxu0 0.0
        %627 = vmatprep.subr.mxu0 0.0
        %628 = vmatpush1.msra.mxu0 0.0
        %629 = vmatprep.subr.mxu0 0.0
        %630 = vmatpush1.msra.mxu0 0.0
        %631 = vmatprep.subr.mxu0 0.0
        %632 = vmatpush1.msra.mxu0 0.0
        %633 = vmatprep.subr.mxu0 0.0
        %634 = vmatpush1.msra.mxu0 0.0
        %635 = vmatprep.subr.mxu0 0.0
        %636 = vmatpush1.msra.mxu0 0.0
        %637 = vmatprep.subr.mxu0 0.0
        %638 = vmatpush1.msra.mxu0 0.0
        %639 = vmatprep.subr.mxu0 0.0
        %640 = vmatpush1.msra.mxu0 0.0
        %641 = vmatprep.subr.mxu0 0.0
        %642 = vmatpush1.msra.mxu0 0.0
        %643 = vmatprep.subr.mxu0 0.0
        %644 = vmatpush1.msra.mxu0 0.0
        %645 = vmatprep.subr.mxu0 0.0
        %646 = vmatpush1.msra.mxu0 0.0
        %647 = vmatprep.subr.mxu0 0.0
        %648 = vmatpush1.msra.mxu0 0.0
        %649 = vmatprep.subr.mxu0 0.0
        %650 = vmatpush1.msra.mxu0 0.0
        %651 = vmatprep.subr.mxu0 0.0
        %652 = vmatpush1.msra.mxu0 0.0
        %653 = vmatprep.subr.mxu0 0.0
        %654 = vmatpush1.msra.mxu0 0.0
        %655 = vmatprep.subr.mxu0 0.0
        %656 = vmatpush1.msra.mxu0 0.0
        %657 = vmatprep.subr.mxu0 0.0
        %658 = vmatpush1.msra.mxu0 0.0
        %659 = vmatprep.subr.mxu0 0.0
        %660 = vmatpush1.msra.mxu0 0.0
        %661 = vmatprep.subr.mxu0 0.0
        %662 = vmatpush1.msra.mxu0 0.0
        %663 = vmatprep.subr.mxu0 0.0
        %664 = vmatpush1.msra.mxu0 0.0
        %665 = vmatprep.subr.mxu0 0.0
        %666 = vmatpush1.msra.mxu0 0.0
        %667 = vmatprep.subr.mxu0 0.0
        %668 = vmatpush1.msra.mxu0 0.0
        %669 = vmatprep.subr.mxu0 0.0
        %670 = vmatpush1.msra.mxu0 0.0
        %671 = vmatprep.mubr.f32.mxu0 0.0
        %672 = vmatmul.mubr.f32.gmra.mrb[0].mxu0 %v602
        %v673 = vpop.f32.mrb[0].mxu0
        %v674 = vadd.f32 0.0, %v673
        %v675 = vpop.f32.mrb[0].mxu0
        %676 = vmatprep.mubr.f32.mxu0 0.0
        %677 = vmatmul.mubr.f32.gmra.mrb[0].mxu0 %v605
        %v678 = vpop.f32.mrb[0].mxu0
        %v679 = vadd.f32 0.0, %v678
        %v680 = vpop.f32.mrb[0].mxu0
        %681 = vdwg.mxu0
        %v682 = vadd.f32 %v593, %v674
        %v683 = vadd.f32 %v594, %v679
        %v684 = vld [vmem:[%s2] sm:$0x1]
        %v686 = vlaneseq
        %v687 = vshrl.u32 %v686, 7
        %v688 = vsub.s32 0, %v687
        %v689 = vrot.slane %v684, %v688
        %v691 = vadd.f32 %v682, %v689
        %v692 = vadd.f32 %v683, %v689
        %v693 = vmax.f32 %v691, 0.0
        %v694 = vmax.f32 %v692, 0.0
        %695 = vst [vmem:[%s223] sm:$0xff] %v693
        %696 = vst [vmem:[%s223 + $0x8] sm:$0xff] %v694
        %v697 = vlaneseq
        %v698 = vshrl.u32 %v697, 7
        %v699 = vadd.s32 %v698, 8
        %v700 = vstv %s243
        %v701 = vadd.s32 %v700, %v698
        %v702 = vadd.s32 %v700, %v699
        %vm703 = vcmp.lt.s32.totalorder %v701, 12
        %vm704 = vcmp.lt.s32.totalorder %v702, 12
        %v705 = vsel %vm703, 1, 0
        %v706 = vsel %vm704, 1, 0
        %vm707 = vcmp.eq.s32.totalorder %v705, 1
        %vm708 = vcmp.eq.s32.totalorder %v706, 1
        %v709 = vsel %vm707, %v693, 0.0
        %v710 = vsel %vm708, %v694, 0.0
        %v711 = vld [vmem:[#allocation4] sm:$0x1]
        %v712 = vadd.f32 %v709, %v710
        %v713 = vrot.slane %v712, 4
        %v714 = vadd.f32 %v712, %v713
        %v715 = vrot.slane %v714, 2
        %v716 = vadd.f32 %v714, %v715
        %v717 = vrot.slane %v716, 1
        %v718 = vadd.f32 %v716, %v717
        %v719 = vadd.f32 %v711, %v718
        %720 = vst [vmem:[#allocation4] sm:$0x1] %v719
        %v721 = vld [vmem:[#allocation6] sm:$0x1]
        %v722 = vmul.f32 %v709, %v709
        %v723 = vmul.f32 %v710, %v710
        %v724 = vadd.f32 %v722, %v723
        %v725 = vrot.slane %v724, 4
        %v726 = vadd.f32 %v724, %v725
        %v727 = vrot.slane %v726, 2
        %v728 = vadd.f32 %v726, %v727
        %v729 = vrot.slane %v728, 1
        %v730 = vadd.f32 %v728, %v729
        %v731 = vadd.f32 %v721, %v730
        %732 = vst [vmem:[#allocation6] sm:$0x1] %v731
        %s733 = sand.u32 %s111, 1
        %s734 = scalar_lea.sflag [#allocation3], %s733
        %s735 = sand.u32 %s111, 1
        %s736 = smul.addr %s735, 16
        %s737 = scalar_lea.vmem [#allocation2], %s736
        // Predicated region
        $region37: #{tpu_custom_call.1} parent=31 // pred_check
          %p738 = pneg %p121
        $region38: #{tpu_custom_call.1} parent=31 // pred_check_branch
          %740 = sbr.rel (%p738) target = $region40
        $region39: #{tpu_custom_call.1} parent=31 // pred_region
          %s741 = sadd.s32 %s25, %s26
          %s742 = smul.u32 2, %s741
          %s744 = ssub.s32 256, 256
          %745 = vsyncadd %s734, %s744
          %s746 = smul.addr %s742, 128
          %s747 = scalar_lea.hbm %s3, %s746
          %s748 = sshll.u32 %s737, 4
          %s749 = int_to_ptr.vmem [resolvable:$true] %s748
          %754 = dma.vmem_to_hbm [thread:$0]  %s749, 256, %s747, %s734, 128, 128, 8
        $region40: #{tpu_custom_call.1} parent=31 // pred_fallthru
          _
        // Predicated region
        $region41: #{tpu_custom_call.1} parent=31 // pred_check
          %p755 = pneg %p142
        $region42: #{tpu_custom_call.1} parent=31 // pred_check_branch
          %757 = sbr.rel (%p755) target = $region44
        $region43: #{tpu_custom_call.1} parent=31 // pred_region
          %s759 = ssub.s32 16, 16
          %760 = vsyncadd [#allocation5], %s759
          %s762 = sshll.u32 [#allocation4], 4
          %s763 = int_to_ptr.vmem [resolvable:$true] %s762
          %765 = dma.vmem_to_hbm [thread:$0]  %s763, 16, %s4, [#allocation5]
        $region44: #{tpu_custom_call.1} parent=31 // pred_fallthru
          _
        // Predicated region
        $region45: #{tpu_custom_call.1} parent=31 // pred_check
          %p766 = pneg %p163
        $region46: #{tpu_custom_call.1} parent=31 // pred_check_branch
          %768 = sbr.rel (%p766) target = $region48
        $region47: #{tpu_custom_call.1} parent=31 // pred_region
          %s770 = ssub.s32 16, 16
          %771 = vsyncadd [#allocation5], %s770
          %s773 = sshll.u32 [#allocation6], 4
          %s774 = int_to_ptr.vmem [resolvable:$true] %s773
          %776 = dma.vmem_to_hbm [thread:$0]  %s774, 16, %s5, [#allocation5]
        $region48: #{tpu_custom_call.1} parent=31 // pred_fallthru
          _
        // Predicated region
        $region49: #{tpu_custom_call.1} parent=31 // pred_check
          %p777 = pneg %p142
        $region50: #{tpu_custom_call.1} parent=31 // pred_check_branch
          %779 = sbr.rel (%p777) target = $region52
        $region51: #{tpu_custom_call.1} parent=31 // pred_region
          %780 = dma.done [#allocation5], 16
        $region52: #{tpu_custom_call.1} parent=31 // pred_fallthru
          _
        // Predicated region
        $region53: #{tpu_custom_call.1} parent=31 // pred_check
          %p781 = pneg %p163
        $region54: #{tpu_custom_call.1} parent=31 // pred_check_branch
          %783 = sbr.rel (%p781) target = $region56
        $region55: #{tpu_custom_call.1} parent=31 // pred_region
          %784 = dma.done [#allocation5], 16
        $region56: #{tpu_custom_call.1} parent=31 // pred_fallthru
          _
      $region32: #{tpu_custom_call.1} parent=5 // pred_fallthru
        _
      %p785 = scmp.le.s32.totalorder 2, %s16
      // Predicated region
      $region57: #{tpu_custom_call.1} parent=5 // pred_check
        %p786 = pneg %p785
      $region58: #{tpu_custom_call.1} parent=5 // pred_check_branch
        %788 = sbr.rel (%p786) target = $region60
      $region59: #{tpu_custom_call.1} parent=5 // pred_region
        %s789 = ssub.s32 %s16, 2
        // Predicated region
        $region61: #{tpu_custom_call.1} parent=59 // pred_check
          %p790 = pneg %p127
        $region62: #{tpu_custom_call.1} parent=59 // pred_check_branch
          %792 = sbr.rel (%p790) target = $region64
        $region63: #{tpu_custom_call.1} parent=59 // pred_region
          %s793 = sand.u32 %s112, 1
          %s794 = scalar_lea.sflag [#allocation3], %s793
          %s795 = sand.u32 %s112, 1
          %s796 = smul.addr %s795, 16
          %s797 = scalar_lea.vmem [#allocation2], %s796
          %798 = dma.done %s794, 256
        $region64: #{tpu_custom_call.1} parent=59 // pred_fallthru
          _
      $region60: #{tpu_custom_call.1} parent=5 // pred_fallthru
        _
    $region6: #{tpu_custom_call.1} parent=1 // loop_footer
      %s20 = sadd.s32 1, %s16
    $region7: #{tpu_custom_call.1} parent=1 // loop_footer_branch
      %15 = sbr.rel target = $region3
    $region8: #{tpu_custom_call.1} parent=1 // loop_exit
      _
    %799 = vsyncpa [#allocation3], 1
    %s800 = scalar_lea.sflag [#allocation3], 1
    %801 = vsyncpa %s800, 1
    %802 = vsyncpa [#allocation5], 1

</llo_original>
